<compile_context>
chip_gen: v7x
topology: tpu7x:2x2x1
jax: 0.10.0
libtpu: 0.0.40
codegen_flags: <defaults>
</compile_context>

<pallas_src>
import functools
import numpy as np
import jax
import jax.numpy as jnp
from jax.experimental import pallas as pl
from jax.experimental.pallas import tpu as pltpu

DIMS_T = (96, 192, 384, 768)      # true convnext_tiny stage widths
DIMS_P = (128, 256, 384, 768)     # lane-dense (128-multiple) padded widths
DEPTHS = (3, 3, 9, 3)             # convnext_tiny stage depths
LN_EPS = 1e-6                     # torchvision ConvNeXt LayerNorm eps
BN_EPS = 1e-5                     # nn.BatchNorm1d default eps
SQRT2 = np.float32(np.sqrt(2.0))


def _pick_tiling():
    # v5e/v6e have 128 MiB physical VMEM -> big row tiles + raised scoped limit.
    # v7x (64 MiB) or unknown hardware -> conservative defaults.
    try:
        info = pltpu.get_tpu_info()
        vmem = int(getattr(info, "vmem_capacity_bytes", 0) or 0)
    except Exception:
        vmem = 0
    if vmem >= 100 * 1024 * 1024:
        return 512, 64 * 1024 * 1024
    return 256, 32 * 1024 * 1024


_TM_MAX, _VMEM_LIMIT = _pick_tiling()


def _zero_map(nd):
    return lambda i: (0,) * nd


# ----------------------------------------------------------------------------
# Fused linear kernel:
#   y = [postLN]( act( [preLN](x) @ w + b ) [+ residual] )
# bf16 MXU inputs / bf16 HBM activations, f32 stats / accumulator / epilogue.
# LayerNorm stats use the TRUE feature count so zero-padded lanes don't perturb
# the result (E[x] = sum/k_true, Var = E[x^2] - E[x]^2; padded entries are 0).
# ----------------------------------------------------------------------------
def _make_linear_kernel(act, pre_ln, has_residual, post_ln, k_true, n_true):
    inv_k = 1.0 / float(k_true)
    inv_n = 1.0 / float(n_true)

    def kernel(*refs):
        idx = 0
        x_ref = refs[idx]; idx += 1
        w_ref = refs[idx]; idx += 1
        b_ref = refs[idx]; idx += 1
        if pre_ln:
            pg_ref, pb_ref = refs[idx], refs[idx + 1]; idx += 2
        if has_residual:
            r_ref = refs[idx]; idx += 1
        if post_ln:
            qg_ref, qb_ref = refs[idx], refs[idx + 1]; idx += 2
        o_ref = refs[idx]

        if pre_ln:
            x = x_ref[...].astype(jnp.float32)
            mu = jnp.sum(x, axis=-1, keepdims=True) * inv_k
            ex2 = jnp.sum(x * x, axis=-1, keepdims=True) * inv_k
            var = jnp.maximum(ex2 - mu * mu, 0.0)
            x = ((x - mu) * jax.lax.rsqrt(var + LN_EPS)) * pg_ref[...] + pb_ref[...]
            xb = x.astype(jnp.bfloat16)
        else:
            xb = x_ref[...].astype(jnp.bfloat16)

        y = jnp.dot(xb, w_ref[...], preferred_element_type=jnp.float32)
        y = y + b_ref[...]
        if act == "relu":
            y = jnp.maximum(y, 0.0)
        elif act == "gelu":                          # exact erf GELU (= torch.nn.GELU)
            y = 0.5 * y * (1.0 + jax.lax.erf(y / SQRT2))
        if has_residual:
            y = y + r_ref[...].astype(jnp.float32)
        if post_ln:
            mu = jnp.sum(y, axis=-1, keepdims=True) * inv_n
            ey2 = jnp.sum(y * y, axis=-1, keepdims=True) * inv_n
            var = jnp.maximum(ey2 - mu * mu, 0.0)
            y = ((y - mu) * jax.lax.rsqrt(var + LN_EPS)) * qg_ref[...] + qb_ref[...]
        o_ref[...] = y.astype(o_ref.dtype)

    return kernel


@functools.lru_cache(maxsize=None)
def _linear_call(M, K, N, act, pre_ln, has_residual, post_ln, k_true, n_true):
    TM = M if M <= _TM_MAX else _TM_MAX
    grid_m = pl.cdiv(M, TM)
    # v7x: when the row grid collapses to one tile, split N across a second
    # "parallel" axis so both TensorCores are used (neutral on 1-TC chips).
    split_n = (grid_m == 1) and (not post_ln) and (N >= 256) and (N % 256 == 0)

    if split_n:
        TN = N // 2
        grid = (grid_m, 2)
        x_map = lambda i, j: (i, 0)
        w_map = lambda i, j: (0, j)
        vecn_map = lambda i, j: (0, j)
        veck_map = lambda i, j: (0, 0)
        out_map = lambda i, j: (i, j)
        sems = ("parallel", "parallel")
    else:
        TN = N
        grid = (grid_m,)
        x_map = lambda i: (i, 0)
        w_map = lambda i: (0, 0)
        vecn_map = lambda i: (0, 0)
        veck_map = lambda i: (0, 0)
        out_map = lambda i: (i, 0)
        sems = ("parallel",)

    # TODO(synk): mark the grid-invariant operands (w, b, LN vectors) with
    # pipeline_mode=pl.Buffered(1) to skip double-buffering them (v7x VMEM headroom).
    in_specs = [pl.BlockSpec((TM, K), x_map),
                pl.BlockSpec((K, TN), w_map),
                pl.BlockSpec((1, TN), vecn_map)]
    if pre_ln:
        in_specs += [pl.BlockSpec((1, K), veck_map)] * 2
    if has_residual:
        in_specs += [pl.BlockSpec((TM, TN), out_map)]
    if post_ln:
        in_specs += [pl.BlockSpec((1, TN), vecn_map)] * 2

    flops = 2 * M * K * N
    bytes_accessed = (2 * M * K + 2 * K * N + 2 * M * N
                      + (2 * M * N if has_residual else 0))
    transcendentals = M * N if act == "gelu" else 0
    return pl.pallas_call(
        _make_linear_kernel(act, pre_ln, has_residual, post_ln, k_true, n_true),
        grid=grid,
        in_specs=in_specs,
        out_specs=pl.BlockSpec((TM, TN), out_map),
        out_shape=jax.ShapeDtypeStruct((M, N), jnp.bfloat16),
        compiler_params=pltpu.CompilerParams(
            dimension_semantics=sems,
            vmem_limit_bytes=_VMEM_LIMIT),
        cost_estimate=pl.CostEstimate(flops=flops, transcendentals=transcendentals,
                                      bytes_accessed=bytes_accessed),
    )


def pallas_linear(x, w, b, *, act="none", pre_ln=None, pre_ln_count=None,
                  residual=None, post_ln=None, post_ln_count=None):
    M, K = x.shape
    N = w.shape[1]
    k_true = pre_ln_count if pre_ln_count is not None else K
    n_true = post_ln_count if post_ln_count is not None else N
    args = [x, w, b.reshape(1, N)]
    if pre_ln is not None:
        args += [pre_ln[0].reshape(1, K), pre_ln[1].reshape(1, K)]
    if residual is not None:
        args += [residual]
    if post_ln is not None:
        args += [post_ln[0].reshape(1, N), post_ln[1].reshape(1, N)]
    fn = _linear_call(M, K, N, act, pre_ln is not None, residual is not None,
                      post_ln is not None, k_true, n_true)
    return fn(*args)


# ----------------------------------------------------------------------------
# 7x7 depthwise conv: grid over batch; in-kernel halo built in a VMEM scratch
# (no HBM jnp.pad round trip); bf16 HBM activations, f32 tap math.
# Scratch column layout: [0..7] zero left halo, [8..8+W) data, [8+W..Wp) zero.
# ----------------------------------------------------------------------------
def _dwconv7_kernel(x_ref, w_ref, b_ref, o_ref, xpad_ref):
    H, W, C = o_ref.shape
    Wp = xpad_ref.shape[1]
    wv = w_ref[...]                                   # (49, C) f32, hoisted
    bv = b_ref[...]                                   # (1, C)  f32

    # Re-zero the halo every grid step: the scratch persists across grid steps and the
    # batch axis may be sharded across TensorCores, so "init on program_id==0" is unsafe.
    zrows = jnp.zeros((3, Wp, C), jnp.float32)
    xpad_ref[0:3, :, :] = zrows
    xpad_ref[H + 3:H + 6, :, :] = zrows
    zleft = jnp.zeros((1, 8, C), jnp.float32)
    zright = jnp.zeros((1, Wp - 8 - W, C), jnp.float32)

    def copy_row(h, carry):
        xpad_ref[pl.ds(h + 3, 1), 0:8, :] = zleft
        xpad_ref[pl.ds(h + 3, 1), 8:8 + W, :] = (
            x_ref[pl.ds(h, 1), :, :].astype(jnp.float32))
        xpad_ref[pl.ds(h + 3, 1), 8 + W:Wp, :] = zright
        return carry

    jax.lax.fori_loop(0, H, copy_row, 0)

    def out_row(h, carry):
        acc = jnp.zeros((1, W, C), jnp.float32)       # one output row stays in vregs
        for dy in range(7):
            r = xpad_ref[pl.ds(h + dy, 1), :, :]      # (1, Wp, C) f32
            for dx in range(7):
                # TODO(synk): move this sublane shift off the VALU (pltpu.roll on the
                # XLU, or per-tap ref loads riding the spare vld slots).
                acc = acc + r[:, dx + 5:dx + 5 + W, :] * wv[dy * 7 + dx:dy * 7 + dx + 1]
        o_ref[pl.ds(h, 1), :, :] = (acc + bv).astype(o_ref.dtype)
        return carry

    jax.lax.fori_loop(0, H, out_row, 0)


@functools.lru_cache(maxsize=None)
def _dwconv7_call(B, H, W, C, Wp):
    # TODO(synk): also tile the grid over H (with a +/-3 row over-read) for finer
    # pipelining and better megacore sharding when B is small/odd.
    return pl.pallas_call(
        _dwconv7_kernel,
        grid=(B,),
        in_specs=[pl.BlockSpec((None, H, W, C), lambda b: (b, 0, 0, 0)),
                  pl.BlockSpec((49, C), _zero_map(2)),
                  pl.BlockSpec((1, C), _zero_map(2))],
        out_specs=pl.BlockSpec((None, H, W, C), lambda b: (b, 0, 0, 0)),
        out_shape=jax.ShapeDtypeStruct((B, H, W, C), jnp.bfloat16),
        scratch_shapes=[pltpu.VMEM((H + 6, Wp, C), jnp.float32)],
        compiler_params=pltpu.CompilerParams(
            dimension_semantics=("parallel",),
            vmem_limit_bytes=_VMEM_LIMIT),
        cost_estimate=pl.CostEstimate(
            flops=2 * B * H * W * C * 49, transcendentals=0,
            bytes_accessed=2 * (2 * B * H * W * C) + 4 * 49 * C),
    )


def pallas_dwconv7(x_nhwc, w49c, bias):
    B, H, W, C = x_nhwc.shape
    Wp = 8 + ((W + 3 + 7) // 8) * 8                   # left halo 8 + data+right halo
    # TODO(synk): fuse this dwconv output directly into the following pre-LN + Lin1
    # matmul to remove one full HBM write+read of the stage activation per CNBlock.
    return _dwconv7_call(B, H, W, C, Wp)(x_nhwc, w49c, bias.reshape(1, C))


# ----------------------------------------------------------------------------
# avgpool + shared MLP + all classifier heads fused into a single call.
# ----------------------------------------------------------------------------
def _head_stack_kernel(f_ref, w1, b1, s1, t1, w2, b2, s2, t2,
                       wh1, bh1, sh, th, wh2, bh2, o_ref):
    pooled = jnp.mean(f_ref[...].astype(jnp.float32), axis=1)   # AvgPool2d(1)+flatten

    def lin(x, w_ref, b_ref, relu=False, s_ref=None, t_ref=None):
        y = jnp.dot(x.astype(jnp.bfloat16), w_ref[...],
                    preferred_element_type=jnp.float32) + b_ref[...]
        if relu:
            y = jnp.maximum(y, 0.0)
        if s_ref is not None:                        # folded BatchNorm1d (eval)
            y = y * s_ref[...] + t_ref[...]
        return y

    h = lin(pooled, w1, b1, True, s1, t1)            # Linear(768,512)+ReLU+BN(+Drop)
    h = lin(h, w2, b2, True, s2, t2)                 # Linear(512,256)+ReLU+BN(+Drop)
    z = lin(h, wh1, bh1, True, sh, th)               # all head hidden layers (concat)
    o_ref[...] = lin(z, wh2, bh2).astype(o_ref.dtype)  # block-diag logits (lane-dense)


@functools.lru_cache(maxsize=None)
def _head_stack_call(B, L, C, Hcat, Npad):
    shapes = [(B, L, C), (C, 512), (1, 512), (1, 512), (1, 512),
              (512, 256), (1, 256), (1, 256), (1, 256),
              (256, Hcat), (1, Hcat), (1, Hcat), (1, Hcat),
              (Hcat, Npad), (1, Npad)]
    return pl.pallas_call(
        _head_stack_kernel,
        grid=(1,),
        in_specs=[pl.BlockSpec(s, _zero_map(len(s))) for s in shapes],
        out_specs=pl.BlockSpec((B, Npad), _zero_map(2)),
        out_shape=jax.ShapeDtypeStruct((B, Npad), jnp.float32),
        compiler_params=pltpu.CompilerParams(
            dimension_semantics=("arbitrary",),
            vmem_limit_bytes=_VMEM_LIMIT),
    )


def pallas_head_stack(feat_blc, shared, heads):
    B, L, C = feat_blc.shape
    Hcat = heads["w1"].shape[1]
    Npad = heads["w2"].shape[1]
    r = lambda v: v.reshape(1, -1)
    return _head_stack_call(B, L, C, Hcat, Npad)(
        feat_blc,
        shared["w1"], r(shared["b1"]), r(shared["s1"]), r(shared["t1"]),
        shared["w2"], r(shared["b2"]), r(shared["s2"]), r(shared["t2"]),
        heads["w1"], r(heads["b1"]), r(heads["s1"]), r(heads["t1"]),
        heads["w2"], r(heads["b2"]))


# ----------------------------------------------------------------------------
# Deterministic synthetic parameters (shapes match convnext_tiny + the heads).
# Channel padding 96->128 / 192->256 is zero-filled so padded lanes stay zero.
# TODO(synk): torchvision pretrained weights are not loadable in-script; synthetic
# weights of identical shapes are used instead.
# ----------------------------------------------------------------------------
def _dense_init(key, fan_in, fan_out):
    kw, kb = jax.random.split(key)
    bound = 1.0 / np.sqrt(fan_in)
    w = jax.random.uniform(kw, (fan_in, fan_out), jnp.float32, -bound, bound)
    b = jax.random.uniform(kb, (fan_out,), jnp.float32, -bound, bound)
    return w, b


def _pad_cols(w, n_pad):
    w = np.asarray(w, np.float32)
    out = np.zeros((w.shape[0], n_pad), np.float32)
    out[:, :w.shape[1]] = w
    return out


def _pad_rows(w, k_pad):
    w = np.asarray(w, np.float32)
    out = np.zeros((k_pad, w.shape[1]), np.float32)
    out[:w.shape[0], :] = w
    return out


def _pad_vec(v, n_pad):
    v = np.asarray(v, np.float32)
    out = np.zeros((n_pad,), np.float32)
    out[:v.shape[0]] = v
    return out


def _bn_fold(c):
    # eval-mode BatchNorm1d folded to scale/shift using default running stats
    gamma = jnp.ones((c,), jnp.float32)
    beta = jnp.zeros((c,), jnp.float32)
    r_mean = jnp.zeros((c,), jnp.float32)
    r_var = jnp.ones((c,), jnp.float32)
    scale = gamma / jnp.sqrt(r_var + BN_EPS)
    shift = beta - r_mean * scale
    return scale, shift


def init_params(key, num_classes_dict):
    kit = iter(jax.random.split(key, 256))
    p = {}
    # stem: Conv2d(3,96,k=4,s=4) as (48, C) matmul; LayerNorm2d fused as post-LN
    w, b = _dense_init(next(kit), 3 * 16, DIMS_T[0])
    p["stem_w"] = jnp.asarray(_pad_cols(w, DIMS_P[0])).astype(jnp.bfloat16)
    p["stem_b"] = jnp.asarray(_pad_vec(b, DIMS_P[0]))
    p["stem_ln_g"] = jnp.asarray(_pad_vec(np.ones(DIMS_T[0]), DIMS_P[0]))
    p["stem_ln_b"] = jnp.zeros((DIMS_P[0],), jnp.float32)

    stages = []
    for ct, cp, depth in zip(DIMS_T, DIMS_P, DEPTHS):
        hd = 4 * ct
        blocks = []
        for _ in range(depth):
            ls = np.full((ct,), 1e-6, np.float32)             # layer_scale init
            w1, b1 = _dense_init(next(kit), ct, hd)
            w2, b2 = _dense_init(next(kit), hd, ct)
            dw = np.zeros((49, cp), np.float32)
            dw[:, :ct] = np.asarray(
                jax.random.normal(next(kit), (49, ct), jnp.float32)) / 7.0
            blocks.append({
                "dw_w": jnp.asarray(dw),
                "dw_b": jnp.zeros((cp,), jnp.float32),
                "ln_g": jnp.asarray(_pad_vec(np.ones(ct), cp)),
                "ln_b": jnp.zeros((cp,), jnp.float32),
                "w1": jnp.asarray(_pad_rows(w1, cp)).astype(jnp.bfloat16),
                "b1": b1,
                # layer_scale folded into w2/b2 (numerically identical)
                "w2": jnp.asarray(_pad_cols(np.asarray(w2) * ls[None, :], cp)
                                  ).astype(jnp.bfloat16),
                "b2": jnp.asarray(_pad_vec(np.asarray(b2) * ls, cp)),
            })
        stages.append(blocks)
    p["stages"] = stages

    downs = []
    for s in range(3):
        ct, cp = DIMS_T[s], DIMS_P[s]
        nt, npd = DIMS_T[s + 1], DIMS_P[s + 1]
        w, b = _dense_init(next(kit), 4 * ct, nt)
        w = np.asarray(w, np.float32)
        wp = np.zeros((4 * cp, npd), np.float32)
        for q in range(4):                                    # per-pixel weight slabs
            wp[q * cp:q * cp + ct, :nt] = w[q * ct:(q + 1) * ct, :]
        downs.append({"ln_g": jnp.asarray(_pad_vec(np.ones(ct), cp)),
                      "ln_b": jnp.zeros((cp,), jnp.float32),
                      "w": jnp.asarray(wp).astype(jnp.bfloat16),
                      "b": jnp.asarray(_pad_vec(b, npd))})
    p["downsamples"] = downs

    w1, b1 = _dense_init(next(kit), DIMS_T[-1], 512)
    s1, t1 = _bn_fold(512)
    w2, b2 = _dense_init(next(kit), 512, 256)
    s2, t2 = _bn_fold(256)
    p["shared"] = dict(w1=w1.astype(jnp.bfloat16), b1=b1, s1=s1, t1=t1,
                       w2=w2.astype(jnp.bfloat16), b2=b2, s2=s2, t2=t2)

    # heads fused: hidden layers concatenated, logit layers block-diagonal,
    # final N padded to a lane-dense 128 multiple (sliced back outside the kernel).
    names, hsizes, ncs = [], [], []
    for target, nc in num_classes_dict.items():
        hsz = 256 if target == "articleType" else (128 if target == "baseColour" else 64)
        names.append(target); hsizes.append(hsz); ncs.append(nc)
    Hcat, Ncat = sum(hsizes), sum(ncs)
    Npad = max(128, ((Ncat + 127) // 128) * 128)
    w1c = np.zeros((256, Hcat), np.float32)
    b1c = np.zeros((Hcat,), np.float32)
    sc = np.zeros((Hcat,), np.float32)
    tc = np.zeros((Hcat,), np.float32)
    w2c = np.zeros((Hcat, Npad), np.float32)
    b2c = np.zeros((Npad,), np.float32)
    offsets = {}
    hoff = noff = 0
    for name, hsz, nc in zip(names, hsizes, ncs):
        hw1, hb1 = _dense_init(next(kit), 256, hsz)
        hs, ht = _bn_fold(hsz)
        hw2, hb2 = _dense_init(next(kit), hsz, nc)
        w1c[:, hoff:hoff + hsz] = np.asarray(hw1)
        b1c[hoff:hoff + hsz] = np.asarray(hb1)
        sc[hoff:hoff + hsz] = np.asarray(hs)
        tc[hoff:hoff + hsz] = np.asarray(ht)
        w2c[hoff:hoff + hsz, noff:noff + nc] = np.asarray(hw2)
        b2c[noff:noff + nc] = np.asarray(hb2)
        offsets[name] = (noff, nc)
        hoff += hsz
        noff += nc
    p["heads"] = dict(w1=jnp.asarray(w1c).astype(jnp.bfloat16), b1=jnp.asarray(b1c),
                      s1=jnp.asarray(sc), t1=jnp.asarray(tc),
                      w2=jnp.asarray(w2c).astype(jnp.bfloat16), b2=jnp.asarray(b2c),
                      offsets=offsets)
    return p


# ----------------------------------------------------------------------------
# Forward pass
# ----------------------------------------------------------------------------
def cn_block(x, blk, c_true, post_ln=None, post_ln_true=None):
    # torchvision CNBlock: x + layer_scale * Lin2(GELU(Lin1(LN(DWConv7(x)))))
    # LN fused into Lin1 (pre-LN); layer_scale folded into Lin2; residual fused;
    # post_ln (the next downsample's LayerNorm2d) optionally fused into Lin2.
    # TODO(synk): StochasticDepth is train-time randomness; eval-mode identity here.
    B, H, W, C = x.shape
    rows = B * H * W
    h = pallas_dwconv7(x, blk["dw_w"], blk["dw_b"]).reshape(rows, C)
    h = pallas_linear(h, blk["w1"], blk["b1"], act="gelu",
                      pre_ln=(blk["ln_g"], blk["ln_b"]), pre_ln_count=c_true)
    h = pallas_linear(h, blk["w2"], blk["b2"],
                      residual=x.reshape(rows, C),
                      post_ln=post_ln, post_ln_count=post_ln_true)
    return h.reshape(B, H, W, C)


def downsample(x_norm, ds):
    # x_norm already carries the downsample LayerNorm2d (fused upstream);
    # 2x2/s2 conv = patchify + matmul (bf16 activations halve the transpose traffic).
    # TODO(synk): fuse this patchify into the matmul kernel (paired-row BlockSpec +
    # 4 weight slabs) to remove the XLA transpose HBM round trip entirely.
    B, H, W, C = x_norm.shape
    patches = (x_norm.reshape(B, H // 2, 2, W // 2, 2, C)
               .transpose(0, 1, 3, 2, 4, 5)
               .reshape(B * (H // 2) * (W // 2), 4 * C))
    h = pallas_linear(patches, ds["w"], ds["b"])
    return h.reshape(B, H // 2, W // 2, ds["w"].shape[1])


def forward(params, x_nchw):
    x = x_nchw.astype(jnp.float32)
    B, Cin, H, W = x.shape
    Ho, Wo = H // 4, W // 4
    # stem: non-overlapping 4x4 patches -> matmul, LayerNorm2d fused as post-LN
    patches = (x.reshape(B, Cin, Ho, 4, Wo, 4)
               .transpose(0, 2, 4, 1, 3, 5)
               .reshape(B * Ho * Wo, Cin * 16))
    h = pallas_linear(patches, params["stem_w"], params["stem_b"],
                      post_ln=(params["stem_ln_g"], params["stem_ln_b"]),
                      post_ln_count=DIMS_T[0])
    feat = h.reshape(B, Ho, Wo, DIMS_P[0])

    for s in range(4):
        blocks = params["stages"][s]
        for bi, blk in enumerate(blocks):
            post_ln = post_ln_true = None
            if s < 3 and bi == len(blocks) - 1:
                ds = params["downsamples"][s]
                post_ln = (ds["ln_g"], ds["ln_b"])            # downsample LN fused here
                post_ln_true = DIMS_T[s]
            feat = cn_block(feat, blk, DIMS_T[s], post_ln, post_ln_true)
        if s < 3:
            feat = downsample(feat, params["downsamples"][s])

    # backbone.classifier == nn.Identity(): no final LN; avgpool + flatten + shared
    # MLP + all heads in ONE fused lane-dense call.
    Bf, Hf, Wf, Cf = feat.shape
    logits = pallas_head_stack(feat.reshape(Bf, Hf * Wf, Cf),
                               params["shared"], params["heads"])
    return {t: logits[:, off:off + nc]
            for t, (off, nc) in params["heads"]["offsets"].items()}


if __name__ == "__main__":
    num_classes_dict = {"articleType": 12, "baseColour": 9, "gender": 5}
    key = jax.random.PRNGKey(0)
    kp, kx = jax.random.split(key)
    params = init_params(kp, num_classes_dict)
    # NCHW, spatial must be a multiple of 32 (ConvNeXt downsamples by 32 overall)
    x = jax.random.normal(kx, (2, 3, 32, 32), jnp.float32)
    outs = forward(params, x)
    outs = jax.tree_util.tree_map(jax.block_until_ready, outs)
    for t, nc in num_classes_dict.items():
        assert outs[t].shape == (2, nc), (t, outs[t].shape)
        assert bool(jnp.all(jnp.isfinite(outs[t])))
    print("KERNEL_OK")
</pallas_src>

<mosaic_0001>
module attributes {stable_mosaic.version = 11 : i64} {
  func.func @kernel(%arg0: i32, %arg1: memref<128x48xf32, #tpu.memory_space<vmem>>, %arg2: memref<48x128xbf16, #tpu.memory_space<vmem>>, %arg3: memref<1x128xf32, #tpu.memory_space<vmem>>, %arg4: memref<1x128xf32, #tpu.memory_space<vmem>>, %arg5: memref<1x128xf32, #tpu.memory_space<vmem>>, %arg6: memref<128x128xbf16, #tpu.memory_space<vmem>>) attributes {dimension_semantics = [#tpu.dimension_semantics<parallel>], iteration_bounds = array<i64: 1>, scalar_prefetch = 0 : i64, scratch_operands = 0 : i64, tpu.core_type = #tpu.core_type<tc>, window_params = [{transform_indices = @transform_0, window_bounds = array<i64: 128, 48>}, {pipeline_mode = #tpu.pipeline_mode<synchronous>, transform_indices = @transform_1, window_bounds = array<i64: 48, 128>}, {pipeline_mode = #tpu.pipeline_mode<synchronous>, transform_indices = @transform_2, window_bounds = array<i64: 1, 128>}, {pipeline_mode = #tpu.pipeline_mode<synchronous>, transform_indices = @transform_3, window_bounds = array<i64: 1, 128>}, {pipeline_mode = #tpu.pipeline_mode<synchronous>, transform_indices = @transform_4, window_bounds = array<i64: 1, 128>}, {transform_indices = @transform_5, window_bounds = array<i64: 128, 128>}]} {
    %c0 = arith.constant 0 : index
    %c0_0 = arith.constant 0 : index
    %0 = vector.load %arg1[%c0, %c0_0] : memref<128x48xf32, #tpu.memory_space<vmem>>, vector<128x48xf32>
    %1 = arith.truncf %0 : vector<128x48xf32> to vector<128x48xbf16>
    %c0_1 = arith.constant 0 : index
    %c0_2 = arith.constant 0 : index
    %2 = vector.load %arg2[%c0_1, %c0_2] : memref<48x128xbf16, #tpu.memory_space<vmem>>, vector<48x128xbf16>
    %cst = arith.constant dense<0.000000e+00> : vector<128x128xf32>
    %3 = tpu.matmul %1, %2, %cst {dimension_numbers = #tpu.dot_dimension_numbers<[1], [0], [0], [1], [0, 0, 1, 1], [], []>} : vector<128x48xbf16>, vector<48x128xbf16>, vector<128x128xf32> -> vector<128x128xf32>
    %c0_3 = arith.constant 0 : index
    %c0_4 = arith.constant 0 : index
    %4 = vector.load %arg3[%c0_3, %c0_4] : memref<1x128xf32, #tpu.memory_space<vmem>>, vector<1x128xf32>
    %5 = vector.broadcast %4 : vector<1x128xf32> to vector<128x128xf32>
    %6 = arith.addf %3, %5 : vector<128x128xf32>
    %cst_5 = arith.constant dense<0.000000e+00> : vector<128xf32>
    %7 = vector.multi_reduction <add>, %6, %cst_5 [1] : vector<128x128xf32> to vector<128xf32>
    %8 = vector.shape_cast %7 : vector<128xf32> to vector<128x1xf32>
    %cst_6 = arith.constant 0.010416667 : f32
    %9 = vector.broadcast %cst_6 : f32 to vector<128x1xf32>
    %10 = arith.mulf %8, %9 : vector<128x1xf32>
    %11 = arith.mulf %6, %6 : vector<128x128xf32>
    %cst_7 = arith.constant dense<0.000000e+00> : vector<128xf32>
    %12 = vector.multi_reduction <add>, %11, %cst_7 [1] : vector<128x128xf32> to vector<128xf32>
    %13 = vector.shape_cast %12 : vector<128xf32> to vector<128x1xf32>
    %cst_8 = arith.constant 0.010416667 : f32
    %14 = vector.broadcast %cst_8 : f32 to vector<128x1xf32>
    %15 = arith.mulf %13, %14 : vector<128x1xf32>
    %16 = arith.mulf %10, %10 : vector<128x1xf32>
    %17 = arith.subf %15, %16 : vector<128x1xf32>
    %cst_9 = arith.constant 0.000000e+00 : f32
    %18 = vector.broadcast %cst_9 : f32 to vector<128x1xf32>
    %19 = arith.maximumf %17, %18 : vector<128x1xf32>
    %20 = vector.broadcast %10 : vector<128x1xf32> to vector<128x128xf32>
    %21 = arith.subf %6, %20 : vector<128x128xf32>
    %cst_10 = arith.constant 9.99999997E-7 : f32
    %22 = vector.broadcast %cst_10 : f32 to vector<128x1xf32>
    %23 = arith.addf %19, %22 : vector<128x1xf32>
    %24 = math.rsqrt %23 : vector<128x1xf32>
    %25 = vector.broadcast %24 : vector<128x1xf32> to vector<128x128xf32>
    %26 = arith.mulf %21, %25 : vector<128x128xf32>
    %c0_11 = arith.constant 0 : index
    %c0_12 = arith.constant 0 : index
    %27 = vector.load %arg4[%c0_11, %c0_12] : memref<1x128xf32, #tpu.memory_space<vmem>>, vector<1x128xf32>
    %28 = vector.broadcast %27 : vector<1x128xf32> to vector<128x128xf32>
    %29 = arith.mulf %26, %28 : vector<128x128xf32>
    %c0_13 = arith.constant 0 : index
    %c0_14 = arith.constant 0 : index
    %30 = vector.load %arg5[%c0_13, %c0_14] : memref<1x128xf32, #tpu.memory_space<vmem>>, vector<1x128xf32>
    %31 = vector.broadcast %30 : vector<1x128xf32> to vector<128x128xf32>
    %32 = arith.addf %29, %31 : vector<128x128xf32>
    %33 = arith.truncf %32 : vector<128x128xf32> to vector<128x128xbf16>
    %c0_15 = arith.constant 0 : index
    %c0_16 = arith.constant 0 : index
    %34 = vector.load %arg6[%c0_15, %c0_16] : memref<128x128xbf16, #tpu.memory_space<vmem>>, vector<128x128xbf16>
    tpu.vector_store %arg6[%c0_15, %c0_16], %33 {strides = array<i32>} : memref<128x128xbf16, #tpu.memory_space<vmem>>, vector<128x128xbf16>,
    return
  }
  func.func @transform_0(%arg0: i32) -> (i32, i32) {
    %c0_i32 = arith.constant 0 : i32
    %c0_i32_0 = arith.constant 0 : i32
    return %arg0, %c0_i32 : i32, i32
  }
  func.func @transform_1(%arg0: i32) -> (i32, i32) {
    %c0_i32 = arith.constant 0 : i32
    %c0_i32_0 = arith.constant 0 : i32
    %c0_i32_1 = arith.constant 0 : i32
    return %c0_i32, %c0_i32_0 : i32, i32
  }
  func.func @transform_2(%arg0: i32) -> (i32, i32) {
    %c0_i32 = arith.constant 0 : i32
    %c0_i32_0 = arith.constant 0 : i32
    %c0_i32_1 = arith.constant 0 : i32
    return %c0_i32, %c0_i32_0 : i32, i32
  }
  func.func @transform_3(%arg0: i32) -> (i32, i32) {
    %c0_i32 = arith.constant 0 : i32
    %c0_i32_0 = arith.constant 0 : i32
    %c0_i32_1 = arith.constant 0 : i32
    return %c0_i32, %c0_i32_0 : i32, i32
  }
  func.func @transform_4(%arg0: i32) -> (i32, i32) {
    %c0_i32 = arith.constant 0 : i32
    %c0_i32_0 = arith.constant 0 : i32
    %c0_i32_1 = arith.constant 0 : i32
    return %c0_i32, %c0_i32_0 : i32, i32
  }
  func.func @transform_5(%arg0: i32) -> (i32, i32) {
    %c0_i32 = arith.constant 0 : i32
    %c0_i32_0 = arith.constant 0 : i32
    return %arg0, %c0_i32 : i32, i32
  }
}

</mosaic_0001>

<llo_original>
// kernel: tpu_custom_call.1
$region0: #{tpu_custom_call.1}
  #allocation0 [shape = 'u32[]', space=smem, size = 0x4, offset = 0x4, fixed_abs, tag = 'smem constant byte address 0x4 - core index']
  #allocation1 [shape = 'u32[144,128]{1,0:T(1,128)}', space=vmem, size = 0x12000, scoped, tag = 'internal scratch']
  %s0 = inlined_call_operand.vmem [shape: f32[128,48], index: 0, kind: input, shape index: {}]
  %s1 = inlined_call_operand.vmem [shape: bf16[48,128], index: 1, kind: input, shape index: {}]
  %s2 = inlined_call_operand.vmem [shape: f32[1,128], index: 2, kind: input, shape index: {}]
  %s3 = inlined_call_operand.vmem [shape: f32[1,128], index: 3, kind: input, shape index: {}]
  %s4 = inlined_call_operand.vmem [shape: f32[1,128], index: 4, kind: input, shape index: {}]
  %s5 = inlined_call_operand.hbm [shape: bf16[128,128], index: 5, kind: output, shape index: {}]
  %s6 = sld [smem:[#allocation0]]
  $region30: #{tpu_custom_call.1} parent=0
    _
  %s8 = ssub.s32 1, %s6
  %s9 = scalar_select 0, %s8, %s6
  $region1: #{tpu_custom_call.1} parent=0
    #allocation2 [shape = 'u8[32768]{0}', space=vmem, size = 0x8000, scoped, tag = 'output window, operand 0, single buffered']
    #allocation3 [shape = 's32[1]{0}', space=sflag, size = 0x4, scoped, tag = 'scoped memory for tpu_custom_call.1']
    %10 = vsyncpa [#allocation3], 0
    // Predicated region
    $region2: #{tpu_custom_call.1} parent=1 // pred_check
      _
    $region3: #{tpu_custom_call.1} parent=1 // pred_check_branch
      %12 = sbr.rel (0) target = $region5
    $region4: #{tpu_custom_call.1} parent=1 // pred_region
      _
    $region5: #{tpu_custom_call.1} parent=1 // pred_fallthru
      _
    // Predicated region
    $region6: #{tpu_custom_call.1} parent=1 // pred_check
      _
    $region7: #{tpu_custom_call.1} parent=1 // pred_check_branch
      %14 = sbr.rel (0) target = $region9
    $region8: #{tpu_custom_call.1} parent=1 // pred_region
      _
    $region9: #{tpu_custom_call.1} parent=1 // pred_fallthru
      _
    // Predicated region
    $region10: #{tpu_custom_call.1} parent=1 // pred_check
      _
    $region11: #{tpu_custom_call.1} parent=1 // pred_check_branch
      %16 = sbr.rel (0) target = $region13
    $region12: #{tpu_custom_call.1} parent=1 // pred_region
      _
    $region13: #{tpu_custom_call.1} parent=1 // pred_fallthru
      _
    // Predicated region
    $region14: #{tpu_custom_call.1} parent=1 // pred_check
      _
    $region15: #{tpu_custom_call.1} parent=1 // pred_check_branch
      %18 = sbr.rel (0) target = $region17
    $region16: #{tpu_custom_call.1} parent=1 // pred_region
      _
    $region17: #{tpu_custom_call.1} parent=1 // pred_fallthru
      _
    // Predicated region
    $region18: #{tpu_custom_call.1} parent=1 // pred_check
      _
    $region19: #{tpu_custom_call.1} parent=1 // pred_check_branch
      %20 = sbr.rel (0) target = $region21
    $region20: #{tpu_custom_call.1} parent=1 // pred_region
      _
    $region21: #{tpu_custom_call.1} parent=1 // pred_fallthru
      _
    %v22 = vld [vmem:[%s0] sm:$0xff]
    %v23 = vld [vmem:[%s0 + $0x8] sm:$0xff]
    %v24 = vld [vmem:[%s0 + $0x10] sm:$0xff]
    %v25 = vld [vmem:[%s0 + $0x18] sm:$0xff]
    %v26 = vld [vmem:[%s0 + $0x20] sm:$0xff]
    %v27 = vld [vmem:[%s0 + $0x28] sm:$0xff]
    %v28 = vld [vmem:[%s0 + $0x30] sm:$0xff]
    %v29 = vld [vmem:[%s0 + $0x38] sm:$0xff]
    %v30 = vld [vmem:[%s0 + $0x40] sm:$0xff]
    %v31 = vld [vmem:[%s0 + $0x48] sm:$0xff]
    %v32 = vld [vmem:[%s0 + $0x50] sm:$0xff]
    %v33 = vld [vmem:[%s0 + $0x58] sm:$0xff]
    %v34 = vld [vmem:[%s0 + $0x60] sm:$0xff]
    %v35 = vld [vmem:[%s0 + $0x68] sm:$0xff]
    %v36 = vld [vmem:[%s0 + $0x70] sm:$0xff]
    %v37 = vld [vmem:[%s0 + $0x78] sm:$0xff]
    %v38 = vpack.c.bf16 %v23, %v22
    %v39 = vpack.c.bf16 %v25, %v24
    %v40 = vpack.c.bf16 %v27, %v26
    %v41 = vpack.c.bf16 %v29, %v28
    %v42 = vpack.c.bf16 %v31, %v30
    %v43 = vpack.c.bf16 %v33, %v32
    %v44 = vpack.c.bf16 %v35, %v34
    %v45 = vpack.c.bf16 %v37, %v36
    %v46 = vld [vmem:[%s1] sm:$0xf]
    %v47 = vld [vmem:[%s1 + $0x4] sm:$0xf]
    %v48 = vld [vmem:[%s1 + $0x8] sm:$0xf]
    %v49 = vld [vmem:[%s1 + $0xc] sm:$0xf]
    %v50 = vld [vmem:[%s1 + $0x10] sm:$0xf]
    %v51 = vld [vmem:[%s1 + $0x14] sm:$0xf]
    %v52 = vld [vmem:[%s2] sm:$0x1]
    %v54 = vlaneseq
    %v55 = vshrl.u32 %v54, 7
    %v56 = vsub.s32 0, %v55
    %v57 = vrot.slane %v52, %v56
    %v65 = vunpack.c.l.b16 %v46
    %v66 = vunpack.c.l.b16 %v47
    %v67 = vunpack.c.l.b16 %v48
    %v68 = vunpack.c.l.b16 %v49
    %v69 = vunpack.c.l.b16 %v50
    %v70 = vunpack.c.l.b16 %v51
    %v71 = vpack.c.b16 %v66, %v65
    %v72 = vpack.c.b16 %v68, %v67
    %v73 = vpack.c.b16 %v70, %v69
    %vm77 = vcmask 392192
    %v79 = vsel %vm77, %v38, 0
    %v82 = vsel %vm77, %v39, 0
    %v85 = vsel %vm77, %v40, 0
    %v88 = vsel %vm77, %v41, 0
    %v91 = vsel %vm77, %v42, 0
    %v94 = vsel %vm77, %v43, 0
    %v97 = vsel %vm77, %v44, 0
    %v100 = vsel %vm77, %v45, 0
    %102 = vmatprep.subr.bf16.mxu0 0
    %103 = vmatpush1.bf16.msra.mxu0 %v71
    %104 = vmatprep.subr.bf16.mxu0 0
    %105 = vmatpush1.bf16.msra.mxu0 %v72
    %106 = vmatprep.subr.bf16.mxu0 0
    %107 = vmatpush1.bf16.msra.mxu0 %v73
    %108 = vmatprep.subr.bf16.mxu0 0
    %109 = vmatpush1.bf16.msra.mxu0 0
    %110 = vmatprep.subr.bf16.mxu0 0
    %111 = vmatpush1.bf16.msra.mxu0 0
    %112 = vmatprep.subr.bf16.mxu0 0
    %113 = vmatpush1.bf16.msra.mxu0 0
    %114 = vmatprep.subr.bf16.mxu0 0
    %115 = vmatpush1.bf16.msra.mxu0 0
    %116 = vmatprep.subr.bf16.mxu0 0
    %117 = vmatpush1.bf16.msra.mxu0 0
    %118 = vmatprep.subr.bf16.mxu0 0
    %119 = vmatpush1.bf16.msra.mxu0 0
    %120 = vmatprep.subr.bf16.mxu0 0
    %121 = vmatpush1.bf16.msra.mxu0 0
    %122 = vmatprep.subr.bf16.mxu0 0
    %123 = vmatpush1.bf16.msra.mxu0 0
    %124 = vmatprep.subr.bf16.mxu0 0
    %125 = vmatpush1.bf16.msra.mxu0 0
    %126 = vmatprep.subr.bf16.mxu0 0
    %127 = vmatpush1.bf16.msra.mxu0 0
    %128 = vmatprep.subr.bf16.mxu0 0
    %129 = vmatpush1.bf16.msra.mxu0 0
    %130 = vmatprep.subr.bf16.mxu0 0
    %131 = vmatpush1.bf16.msra.mxu0 0
    %132 = vmatprep.subr.bf16.mxu0 0
    %133 = vmatpush1.bf16.msra.mxu0 0
    %134 = vmatprep.mubr.bf16.mxu0 0
    %135 = vmatmul.mubr.bf16.gmra.mrb[0].mxu0 %v79
    %v136 = vpop.f32.mrb[0].mxu0
    %v137 = vadd.f32 %v57, %v136
    %v138 = vpop.f32.mrb[0].mxu0
    %v139 = vpop.f32.mrb[0].mxu0
    %v140 = vadd.f32 %v57, %v139
    %v141 = vpop.f32.mrb[0].mxu0
    %142 = vmatprep.mubr.bf16.mxu0 0
    %143 = vmatmul.mubr.bf16.gmra.mrb[0].mxu0 %v82
    %v144 = vpop.f32.mrb[0].mxu0
    %v145 = vadd.f32 %v57, %v144
    %v146 = vpop.f32.mrb[0].mxu0
    %v147 = vpop.f32.mrb[0].mxu0
    %v148 = vadd.f32 %v57, %v147
    %v149 = vpop.f32.mrb[0].mxu0
    %150 = vmatprep.mubr.bf16.mxu0 0
    %151 = vmatmul.mubr.bf16.gmra.mrb[0].mxu0 %v85
    %v152 = vpop.f32.mrb[0].mxu0
    %v153 = vadd.f32 %v57, %v152
    %v154 = vpop.f32.mrb[0].mxu0
    %v155 = vpop.f32.mrb[0].mxu0
    %v156 = vadd.f32 %v57, %v155
    %v157 = vpop.f32.mrb[0].mxu0
    %158 = vmatprep.mubr.bf16.mxu0 0
    %159 = vmatmul.mubr.bf16.gmra.mrb[0].mxu0 %v88
    %v160 = vpop.f32.mrb[0].mxu0
    %v161 = vadd.f32 %v57, %v160
    %v162 = vpop.f32.mrb[0].mxu0
    %v163 = vpop.f32.mrb[0].mxu0
    %v164 = vadd.f32 %v57, %v163
    %v165 = vpop.f32.mrb[0].mxu0
    %166 = vmatprep.mubr.bf16.mxu0 0
    %167 = vmatmul.mubr.bf16.gmra.mrb[0].mxu0 %v91
    %v168 = vpop.f32.mrb[0].mxu0
    %v169 = vadd.f32 %v57, %v168
    %v170 = vpop.f32.mrb[0].mxu0
    %v171 = vpop.f32.mrb[0].mxu0
    %v172 = vadd.f32 %v57, %v171
    %v173 = vpop.f32.mrb[0].mxu0
    %174 = vmatprep.mubr.bf16.mxu0 0
    %175 = vmatmul.mubr.bf16.gmra.mrb[0].mxu0 %v94
    %v176 = vpop.f32.mrb[0].mxu0
    %v177 = vadd.f32 %v57, %v176
    %v178 = vpop.f32.mrb[0].mxu0
    %v179 = vpop.f32.mrb[0].mxu0
    %v180 = vadd.f32 %v57, %v179
    %v181 = vpop.f32.mrb[0].mxu0
    %182 = vmatprep.mubr.bf16.mxu0 0
    %183 = vmatmul.mubr.bf16.gmra.mrb[0].mxu0 %v97
    %v184 = vpop.f32.mrb[0].mxu0
    %v185 = vadd.f32 %v57, %v184
    %v186 = vpop.f32.mrb[0].mxu0
    %v187 = vpop.f32.mrb[0].mxu0
    %v188 = vadd.f32 %v57, %v187
    %v189 = vpop.f32.mrb[0].mxu0
    %190 = vmatprep.mubr.bf16.mxu0 0
    %191 = vmatmul.mubr.bf16.gmra.mrb[0].mxu0 %v100
    %v192 = vpop.f32.mrb[0].mxu0
    %v193 = vadd.f32 %v57, %v192
    %v194 = vpop.f32.mrb[0].mxu0
    %v195 = vpop.f32.mrb[0].mxu0
    %v196 = vadd.f32 %v57, %v195
    %v197 = vpop.f32.mrb[0].mxu0
    %198 = vdwg.mxu0
    %199 = vadd.xlane.f32.xlu0 %v137
    %v200 = vpop.xlane.xlu0 %199
    %201 = vadd.xlane.f32.xlu0 %v140
    %v202 = vpop.xlane.xlu0 %201
    %203 = vadd.xlane.f32.xlu0 %v145
    %v204 = vpop.xlane.xlu0 %203
    %205 = vadd.xlane.f32.xlu0 %v148
    %v206 = vpop.xlane.xlu0 %205
    %207 = vadd.xlane.f32.xlu0 %v153
    %v208 = vpop.xlane.xlu0 %207
    %209 = vadd.xlane.f32.xlu0 %v156
    %v210 = vpop.xlane.xlu0 %209
    %211 = vadd.xlane.f32.xlu0 %v161
    %v212 = vpop.xlane.xlu0 %211
    %213 = vadd.xlane.f32.xlu0 %v164
    %v214 = vpop.xlane.xlu0 %213
    %215 = vadd.xlane.f32.xlu0 %v169
    %v216 = vpop.xlane.xlu0 %215
    %217 = vadd.xlane.f32.xlu0 %v172
    %v218 = vpop.xlane.xlu0 %217
    %219 = vadd.xlane.f32.xlu0 %v177
    %v220 = vpop.xlane.xlu0 %219
    %221 = vadd.xlane.f32.xlu0 %v180
    %v222 = vpop.xlane.xlu0 %221
    %223 = vadd.xlane.f32.xlu0 %v185
    %v224 = vpop.xlane.xlu0 %223
    %225 = vadd.xlane.f32.xlu0 %v188
    %v226 = vpop.xlane.xlu0 %225
    %227 = vadd.xlane.f32.xlu0 %v193
    %v228 = vpop.xlane.xlu0 %227
    %229 = vadd.xlane.f32.xlu0 %v196
    %v230 = vpop.xlane.xlu0 %229
    %v231 = vmul.f32 %v200, 0.010416667
    %v232 = vmul.f32 %v202, 0.010416667
    %v233 = vmul.f32 %v204, 0.010416667
    %v234 = vmul.f32 %v206, 0.010416667
    %v235 = vmul.f32 %v208, 0.010416667
    %v236 = vmul.f32 %v210, 0.010416667
    %v237 = vmul.f32 %v212, 0.010416667
    %v238 = vmul.f32 %v214, 0.010416667
    %v239 = vmul.f32 %v216, 0.010416667
    %v240 = vmul.f32 %v218, 0.010416667
    %v241 = vmul.f32 %v220, 0.010416667
    %v242 = vmul.f32 %v222, 0.010416667
    %v243 = vmul.f32 %v224, 0.010416667
    %v244 = vmul.f32 %v226, 0.010416667
    %v245 = vmul.f32 %v228, 0.010416667
    %v246 = vmul.f32 %v230, 0.010416667
    %v247 = vmul.f32 %v137, %v137
    %v248 = vmul.f32 %v140, %v140
    %v249 = vmul.f32 %v145, %v145
    %v250 = vmul.f32 %v148, %v148
    %v251 = vmul.f32 %v153, %v153
    %v252 = vmul.f32 %v156, %v156
    %v253 = vmul.f32 %v161, %v161
    %v254 = vmul.f32 %v164, %v164
    %v255 = vmul.f32 %v169, %v169
    %v256 = vmul.f32 %v172, %v172
    %v257 = vmul.f32 %v177, %v177
    %v258 = vmul.f32 %v180, %v180
    %v259 = vmul.f32 %v185, %v185
    %v260 = vmul.f32 %v188, %v188
    %v261 = vmul.f32 %v193, %v193
    %v262 = vmul.f32 %v196, %v196
    %263 = vadd.xlane.f32.xlu0 %v247
    %v264 = vpop.xlane.xlu0 %263
    %265 = vadd.xlane.f32.xlu0 %v248
    %v266 = vpop.xlane.xlu0 %265
    %267 = vadd.xlane.f32.xlu0 %v249
    %v268 = vpop.xlane.xlu0 %267
    %269 = vadd.xlane.f32.xlu0 %v250
    %v270 = vpop.xlane.xlu0 %269
    %271 = vadd.xlane.f32.xlu0 %v251
    %v272 = vpop.xlane.xlu0 %271
    %273 = vadd.xlane.f32.xlu0 %v252
    %v274 = vpop.xlane.xlu0 %273
    %275 = vadd.xlane.f32.xlu0 %v253
    %v276 = vpop.xlane.xlu0 %275
    %277 = vadd.xlane.f32.xlu0 %v254
    %v278 = vpop.xlane.xlu0 %277
    %279 = vadd.xlane.f32.xlu0 %v255
    %v280 = vpop.xlane.xlu0 %279
    %281 = vadd.xlane.f32.xlu0 %v256
    %v282 = vpop.xlane.xlu0 %281
    %283 = vadd.xlane.f32.xlu0 %v257
    %v284 = vpop.xlane.xlu0 %283
    %285 = vadd.xlane.f32.xlu0 %v258
    %v286 = vpop.xlane.xlu0 %285
    %287 = vadd.xlane.f32.xlu0 %v259
    %v288 = vpop.xlane.xlu0 %287
    %289 = vadd.xlane.f32.xlu0 %v260
    %v290 = vpop.xlane.xlu0 %289
    %291 = vadd.xlane.f32.xlu0 %v261
    %v292 = vpop.xlane.xlu0 %291
    %293 = vadd.xlane.f32.xlu0 %v262
    %v294 = vpop.xlane.xlu0 %293
    %v295 = vmul.f32 %v264, 0.010416667
    %v296 = vmul.f32 %v266, 0.010416667
    %v297 = vmul.f32 %v268, 0.010416667
    %v298 = vmul.f32 %v270, 0.010416667
    %v299 = vmul.f32 %v272, 0.010416667
    %v300 = vmul.f32 %v274, 0.010416667
    %v301 = vmul.f32 %v276, 0.010416667
    %v302 = vmul.f32 %v278, 0.010416667
    %v303 = vmul.f32 %v280, 0.010416667
    %v304 = vmul.f32 %v282, 0.010416667
    %v305 = vmul.f32 %v284, 0.010416667
    %v306 = vmul.f32 %v286, 0.010416667
    %v307 = vmul.f32 %v288, 0.010416667
    %v308 = vmul.f32 %v290, 0.010416667
    %v309 = vmul.f32 %v292, 0.010416667
    %v310 = vmul.f32 %v294, 0.010416667
    %v311 = vmul.f32 %v231, %v231
    %v312 = vmul.f32 %v232, %v232
    %v313 = vmul.f32 %v233, %v233
    %v314 = vmul.f32 %v234, %v234
    %v315 = vmul.f32 %v235, %v235
    %v316 = vmul.f32 %v236, %v236
    %v317 = vmul.f32 %v237, %v237
    %v318 = vmul.f32 %v238, %v238
    %v319 = vmul.f32 %v239, %v239
    %v320 = vmul.f32 %v240, %v240
    %v321 = vmul.f32 %v241, %v241
    %v322 = vmul.f32 %v242, %v242
    %v323 = vmul.f32 %v243, %v243
    %v324 = vmul.f32 %v244, %v244
    %v325 = vmul.f32 %v245, %v245
    %v326 = vmul.f32 %v246, %v246
    %v327 = vsub.f32 %v295, %v311
    %v328 = vsub.f32 %v296, %v312
    %v329 = vsub.f32 %v297, %v313
    %v330 = vsub.f32 %v298, %v314
    %v331 = vsub.f32 %v299, %v315
    %v332 = vsub.f32 %v300, %v316
    %v333 = vsub.f32 %v301, %v317
    %v334 = vsub.f32 %v302, %v318
    %v335 = vsub.f32 %v303, %v319
    %v336 = vsub.f32 %v304, %v320
    %v337 = vsub.f32 %v305, %v321
    %v338 = vsub.f32 %v306, %v322
    %v339 = vsub.f32 %v307, %v323
    %v340 = vsub.f32 %v308, %v324
    %v341 = vsub.f32 %v309, %v325
    %v342 = vsub.f32 %v310, %v326
    %v343 = vmax.f32 %v327, 0.0
    %v344 = vmax.f32 %v328, 0.0
    %v345 = vmax.f32 %v329, 0.0
    %v346 = vmax.f32 %v330, 0.0
    %v347 = vmax.f32 %v331, 0.0
    %v348 = vmax.f32 %v332, 0.0
    %v349 = vmax.f32 %v333, 0.0
    %v350 = vmax.f32 %v334, 0.0
    %v351 = vmax.f32 %v335, 0.0
    %v352 = vmax.f32 %v336, 0.0
    %v353 = vmax.f32 %v337, 0.0
    %v354 = vmax.f32 %v338, 0.0
    %v355 = vmax.f32 %v339, 0.0
    %v356 = vmax.f32 %v340, 0.0
    %v357 = vmax.f32 %v341, 0.0
    %v358 = vmax.f32 %v342, 0.0
    %v359 = vsub.f32 %v137, %v231
    %v360 = vsub.f32 %v140, %v232
    %v361 = vsub.f32 %v145, %v233
    %v362 = vsub.f32 %v148, %v234
    %v363 = vsub.f32 %v153, %v235
    %v364 = vsub.f32 %v156, %v236
    %v365 = vsub.f32 %v161, %v237
    %v366 = vsub.f32 %v164, %v238
    %v367 = vsub.f32 %v169, %v239
    %v368 = vsub.f32 %v172, %v240
    %v369 = vsub.f32 %v177, %v241
    %v370 = vsub.f32 %v180, %v242
    %v371 = vsub.f32 %v185, %v243
    %v372 = vsub.f32 %v188, %v244
    %v373 = vsub.f32 %v193, %v245
    %v374 = vsub.f32 %v196, %v246
    %v375 = vadd.f32 %v343, 1e-06
    %v376 = vadd.f32 %v344, 1e-06
    %v377 = vadd.f32 %v345, 1e-06
    %v378 = vadd.f32 %v346, 1e-06
    %v379 = vadd.f32 %v347, 1e-06
    %v380 = vadd.f32 %v348, 1e-06
    %v381 = vadd.f32 %v349, 1e-06
    %v382 = vadd.f32 %v350, 1e-06
    %v383 = vadd.f32 %v351, 1e-06
    %v384 = vadd.f32 %v352, 1e-06
    %v385 = vadd.f32 %v353, 1e-06
    %v386 = vadd.f32 %v354, 1e-06
    %v387 = vadd.f32 %v355, 1e-06
    %v388 = vadd.f32 %v356, 1e-06
    %v389 = vadd.f32 %v357, 1e-06
    %v390 = vadd.f32 %v358, 1e-06
    %v391 = vrsqrt.pop %v375
    %v392 = vrsqrt.pop %v376
    %v393 = vrsqrt.pop %v377
    %v394 = vrsqrt.pop %v378
    %v395 = vrsqrt.pop %v379
    %v396 = vrsqrt.pop %v380
    %v397 = vrsqrt.pop %v381
    %v398 = vrsqrt.pop %v382
    %v399 = vrsqrt.pop %v383
    %v400 = vrsqrt.pop %v384
    %v401 = vrsqrt.pop %v385
    %v402 = vrsqrt.pop %v386
    %v403 = vrsqrt.pop %v387
    %v404 = vrsqrt.pop %v388
    %v405 = vrsqrt.pop %v389
    %v406 = vrsqrt.pop %v390
    %v407 = vmul.f32 %v359, %v391
    %v408 = vmul.f32 %v360, %v392
    %v409 = vmul.f32 %v361, %v393
    %v410 = vmul.f32 %v362, %v394
    %v411 = vmul.f32 %v363, %v395
    %v412 = vmul.f32 %v364, %v396
    %v413 = vmul.f32 %v365, %v397
    %v414 = vmul.f32 %v366, %v398
    %v415 = vmul.f32 %v367, %v399
    %v416 = vmul.f32 %v368, %v400
    %v417 = vmul.f32 %v369, %v401
    %v418 = vmul.f32 %v370, %v402
    %v419 = vmul.f32 %v371, %v403
    %v420 = vmul.f32 %v372, %v404
    %v421 = vmul.f32 %v373, %v405
    %v422 = vmul.f32 %v374, %v406
    %v423 = vld [vmem:[%s3] sm:$0x1]
    %v425 = vlaneseq
    %v426 = vshrl.u32 %v425, 7
    %v427 = vsub.s32 0, %v426
    %v428 = vrot.slane %v423, %v427
    %v430 = vmul.f32 %v407, %v428
    %v431 = vmul.f32 %v408, %v428
    %v432 = vmul.f32 %v409, %v428
    %v433 = vmul.f32 %v410, %v428
    %v434 = vmul.f32 %v411, %v428
    %v435 = vmul.f32 %v412, %v428
    %v436 = vmul.f32 %v413, %v428
    %v437 = vmul.f32 %v414, %v428
    %v438 = vmul.f32 %v415, %v428
    %v439 = vmul.f32 %v416, %v428
    %v440 = vmul.f32 %v417, %v428
    %v441 = vmul.f32 %v418, %v428
    %v442 = vmul.f32 %v419, %v428
    %v443 = vmul.f32 %v420, %v428
    %v444 = vmul.f32 %v421, %v428
    %v445 = vmul.f32 %v422, %v428
    %v446 = vld [vmem:[%s4] sm:$0x1]
    %v448 = vlaneseq
    %v449 = vshrl.u32 %v448, 7
    %v450 = vsub.s32 0, %v449
    %v451 = vrot.slane %v446, %v450
    %v453 = vadd.f32 %v430, %v451
    %v454 = vadd.f32 %v431, %v451
    %v455 = vadd.f32 %v432, %v451
    %v456 = vadd.f32 %v433, %v451
    %v457 = vadd.f32 %v434, %v451
    %v458 = vadd.f32 %v435, %v451
    %v459 = vadd.f32 %v436, %v451
    %v460 = vadd.f32 %v437, %v451
    %v461 = vadd.f32 %v438, %v451
    %v462 = vadd.f32 %v439, %v451
    %v463 = vadd.f32 %v440, %v451
    %v464 = vadd.f32 %v441, %v451
    %v465 = vadd.f32 %v442, %v451
    %v466 = vadd.f32 %v443, %v451
    %v467 = vadd.f32 %v444, %v451
    %v468 = vadd.f32 %v445, %v451
    %v469 = vpack.c.bf16 %v454, %v453
    %v470 = vpack.c.bf16 %v456, %v455
    %v471 = vpack.c.bf16 %v458, %v457
    %v472 = vpack.c.bf16 %v460, %v459
    %v473 = vpack.c.bf16 %v462, %v461
    %v474 = vpack.c.bf16 %v464, %v463
    %v475 = vpack.c.bf16 %v466, %v465
    %v476 = vpack.c.bf16 %v468, %v467
    %v485 = vunpack.c.l.b16 %v469
    %v486 = vunpack.c.h.b16 %v469
    %v487 = vunpack.c.l.b16 %v470
    %v488 = vunpack.c.h.b16 %v470
    %v489 = vunpack.c.l.b16 %v471
    %v490 = vunpack.c.h.b16 %v471
    %v491 = vunpack.c.l.b16 %v472
    %v492 = vunpack.c.h.b16 %v472
    %v493 = vunpack.c.l.b16 %v473
    %v494 = vunpack.c.h.b16 %v473
    %v495 = vunpack.c.l.b16 %v474
    %v496 = vunpack.c.h.b16 %v474
    %v497 = vunpack.c.l.b16 %v475
    %v498 = vunpack.c.h.b16 %v475
    %v499 = vunpack.c.l.b16 %v476
    %v500 = vunpack.c.h.b16 %v476
    %v501 = vpack.c.b16 %v485, %v485
    %v502 = vpack.c.b16 %v486, %v486
    %v503 = vpack.c.b16 %v487, %v487
    %v504 = vpack.c.b16 %v488, %v488
    %v505 = vpack.c.b16 %v489, %v489
    %v506 = vpack.c.b16 %v490, %v490
    %v507 = vpack.c.b16 %v491, %v491
    %v508 = vpack.c.b16 %v492, %v492
    %v509 = vpack.c.b16 %v493, %v493
    %v510 = vpack.c.b16 %v494, %v494
    %v511 = vpack.c.b16 %v495, %v495
    %v512 = vpack.c.b16 %v496, %v496
    %v513 = vpack.c.b16 %v497, %v497
    %v514 = vpack.c.b16 %v498, %v498
    %v515 = vpack.c.b16 %v499, %v499
    %v516 = vpack.c.b16 %v500, %v500
    %533 = vst [vmem:[#allocation2] sm:$0xf] %v501
    %534 = vst [vmem:[#allocation2 + $0x4] sm:$0xf] %v502
    %535 = vst [vmem:[#allocation2 + $0x8] sm:$0xf] %v503
    %536 = vst [vmem:[#allocation2 + $0xc] sm:$0xf] %v504
    %537 = vst [vmem:[#allocation2 + $0x10] sm:$0xf] %v505
    %538 = vst [vmem:[#allocation2 + $0x14] sm:$0xf] %v506
    %539 = vst [vmem:[#allocation2 + $0x18] sm:$0xf] %v507
    %540 = vst [vmem:[#allocation2 + $0x1c] sm:$0xf] %v508
    %541 = vst [vmem:[#allocation2 + $0x20] sm:$0xf] %v509
    %542 = vst [vmem:[#allocation2 + $0x24] sm:$0xf] %v510
    %543 = vst [vmem:[#allocation2 + $0x28] sm:$0xf] %v511
    %544 = vst [vmem:[#allocation2 + $0x2c] sm:$0xf] %v512
    %545 = vst [vmem:[#allocation2 + $0x30] sm:$0xf] %v513
    %546 = vst [vmem:[#allocation2 + $0x34] sm:$0xf] %v514
    %547 = vst [vmem:[#allocation2 + $0x38] sm:$0xf] %v515
    %548 = vst [vmem:[#allocation2 + $0x3c] sm:$0xf] %v516
    // Predicated region
    $region22: #{tpu_custom_call.1} parent=1 // pred_check
      _
    $region23: #{tpu_custom_call.1} parent=1 // pred_check_branch
      %550 = sbr.rel (0) target = $region25
    $region24: #{tpu_custom_call.1} parent=1 // pred_region
      %s552 = ssub.s32 1024, 1024
      %553 = vsyncadd [#allocation3], %s552
      %s554 = sshll.u32 [#allocation2], 4
      %s555 = int_to_ptr.vmem [resolvable:$true] %s554
      %560 = dma.vmem_to_hbm [thread:$0]  %s555, 1024, %s5, [#allocation3], 64, 64, 4
    $region25: #{tpu_custom_call.1} parent=1 // pred_fallthru
      _
    // Predicated region
    $region26: #{tpu_custom_call.1} parent=1 // pred_check
      _
    $region27: #{tpu_custom_call.1} parent=1 // pred_check_branch
      %562 = sbr.rel (0) target = $region29
    $region28: #{tpu_custom_call.1} parent=1 // pred_region
      %563 = dma.done [#allocation3], 1024
    $region29: #{tpu_custom_call.1} parent=1 // pred_fallthru
      _
    %564 = vsyncpa [#allocation3], 1

</llo_original>
